<compile_context>
chip_gen: v7x
topology: tpu7x:2x2x1
jax: 0.10.0
libtpu: 0.0.40
codegen_flags: <defaults>
</compile_context>

<pallas_src>
import jax
import jax.numpy as jnp
from jax.experimental import pallas as pl
from jax.experimental.pallas import tpu as pltpu


def _round_up(n, m):
    return ((n + m - 1) // m) * m


def _mlp_kernel(x_ref, w1_ref, b1_ref, w2_ref, b2_ref, w3_ref, b3_ref, o_ref):
    # Layout: activations (features, batch_tile); batch on lanes, feats on sublanes.
    # Layer 1: Linear + ReLU   (bf16 MXU matmul, f32 accumulate / bias / ReLU)
    h = jnp.dot(w1_ref[...], x_ref[...], preferred_element_type=jnp.float32)
    h = jnp.maximum(h + b1_ref[...], 0.0)
    # Layer 2
    h = jnp.dot(w2_ref[...], h.astype(w2_ref.dtype),
                preferred_element_type=jnp.float32)
    h = jnp.maximum(h + b2_ref[...], 0.0)
    # Layer 3
    h = jnp.dot(w3_ref[...], h.astype(w3_ref.dtype),
                preferred_element_type=jnp.float32)
    h = jnp.maximum(h + b3_ref[...], 0.0)
    o_ref[...] = h.astype(o_ref.dtype)


def feature_extractor(x, params, *, block_batch=512, compute_dtype=jnp.bfloat16):
    """x: (B, input_dim) float32. params: dict of w1,b1,w2,b2,w3,b3 (PyTorch (out,in) layout)."""
    B, input_dim = x.shape
    hidden_dim = params["w1"].shape[0]

    # ---- padding: features to bf16 sublane multiple (16), batch to lane tile ----
    IN_P = _round_up(input_dim, 16)
    H_P = _round_up(hidden_dim, 16)
    TB = _round_up(min(block_batch, _round_up(B, 128)), 128)   # batch tile (lanes)
    B_P = _round_up(B, TB)

    def pad_w(w, rows, cols):
        out = jnp.zeros((rows, cols), compute_dtype)
        return out.at[: w.shape[0], : w.shape[1]].set(w.astype(compute_dtype))

    def pad_b(b, rows):
        out = jnp.zeros((rows, 1), jnp.float32)     # zero-padded bias: ReLU(0)=0, no leak
        return out.at[: b.shape[0], 0].set(b.astype(jnp.float32))

    w1 = pad_w(params["w1"], H_P, IN_P)
    w2 = pad_w(params["w2"], H_P, H_P)
    w3 = pad_w(params["w3"], H_P, H_P)
    b1 = pad_b(params["b1"], H_P)
    b2 = pad_b(params["b2"], H_P)
    b3 = pad_b(params["b3"], H_P)

    # (B, in) -> (IN_P, B_P): batch on the lane axis, zero-padded features & batch.
    xt = jnp.zeros((IN_P, B_P), compute_dtype)
    xt = xt.at[:input_dim, :B].set(x.T.astype(compute_dtype))

    grid = (B_P // TB,)

    # ---- compiler hints: VMEM budget + cost estimate ----
    resident = (w1.size + w2.size + w3.size) * 2 + (b1.size + b2.size + b3.size) * 4
    per_step = IN_P * TB * 2 + H_P * TB * 4            # x tile (bf16) + out tile (f32)
    scratch = 3 * H_P * TB * 4                         # intermediate activations (rough)
    needed = resident + 2 * per_step + scratch         # 2x for double buffering
    vmem_limit = int(min(64 * 1024 * 1024, max(16 * 1024 * 1024, 4 * needed)))

    flops = 2 * B_P * (IN_P * H_P + 2 * H_P * H_P)
    bytes_accessed = (xt.size * 2
                      + (w1.size + w2.size + w3.size) * 2
                      + (b1.size + b2.size + b3.size) * 4
                      + H_P * B_P * 4)
    cost = pl.CostEstimate(flops=flops, transcendentals=0,
                           bytes_accessed=bytes_accessed)

    out_p = pl.pallas_call(
        _mlp_kernel,
        out_shape=jax.ShapeDtypeStruct((H_P, B_P), jnp.float32),
        grid=grid,
        in_specs=[
            pl.BlockSpec((IN_P, TB), lambda i: (0, i)),   # x tile: pipelined over batch
            pl.BlockSpec((H_P, IN_P), lambda i: (0, 0)),  # w1: resident
            pl.BlockSpec((H_P, 1), lambda i: (0, 0)),     # b1: resident
            pl.BlockSpec((H_P, H_P), lambda i: (0, 0)),   # w2
            pl.BlockSpec((H_P, 1), lambda i: (0, 0)),     # b2
            pl.BlockSpec((H_P, H_P), lambda i: (0, 0)),   # w3
            pl.BlockSpec((H_P, 1), lambda i: (0, 0)),     # b3
        ],
        out_specs=pl.BlockSpec((H_P, TB), lambda i: (0, i)),
        compiler_params=pltpu.CompilerParams(
            dimension_semantics=("parallel",),
            vmem_limit_bytes=vmem_limit,
        ),
        cost_estimate=cost,
    )(xt, w1, b1, w2, b2, w3, b3)

    # Slice off feature/batch padding, return (B, hidden_dim).
    return out_p[:hidden_dim, :B].T


def init_params(key, input_dim, hidden_dim):
    """Deterministic init mimicking nn.Linear defaults (uniform +/- 1/sqrt(fan_in))."""
    ks = jax.random.split(key, 6)

    def lin(kw, kb, fan_in, fan_out):
        bound = 1.0 / jnp.sqrt(jnp.float32(fan_in))
        w = jax.random.uniform(kw, (fan_out, fan_in), jnp.float32, -bound, bound)
        b = jax.random.uniform(kb, (fan_out,), jnp.float32, -bound, bound)
        return w, b

    w1, b1 = lin(ks[0], ks[1], input_dim, hidden_dim)
    w2, b2 = lin(ks[2], ks[3], hidden_dim, hidden_dim)
    w3, b3 = lin(ks[4], ks[5], hidden_dim, hidden_dim)
    return dict(w1=w1, b1=b1, w2=w2, b2=b2, w3=w3, b3=b3)


def feature_extractor_ref(x, p):
    h = jnp.maximum(x @ p["w1"].T + p["b1"], 0.0)
    h = jnp.maximum(h @ p["w2"].T + p["b2"], 0.0)
    h = jnp.maximum(h @ p["w3"].T + p["b3"], 0.0)
    return h


if __name__ == "__main__":
    key = jax.random.PRNGKey(0)
    k_params, k_x = jax.random.split(key)

    batch = 8
    input_dim = 16   # X_train.shape[1] stand-in
    hidden_dim = 10  # module's hidden_dim

    params = init_params(k_params, input_dim, hidden_dim)
    x = jax.random.normal(k_x, (batch, input_dim), jnp.float32)

    out = feature_extractor(x, params)
    out = jax.block_until_ready(out)

    ref = feature_extractor_ref(x, params)
    assert out.shape == (batch, hidden_dim)
    # bf16 MXU inputs (f32 accumulation) -> relaxed tolerance vs pure-f32 reference.
    assert jnp.allclose(out, ref, atol=3e-2, rtol=3e-2), float(jnp.max(jnp.abs(out - ref)))

    print("KERNEL_OK")
</pallas_src>

<mosaic_0001>
module attributes {stable_mosaic.version = 11 : i64} {
  func.func @_mlp_kernel(%arg0: i32, %arg1: memref<16x128xbf16, #tpu.memory_space<vmem>>, %arg2: memref<16x16xbf16, #tpu.memory_space<vmem>>, %arg3: memref<16x1xf32, #tpu.memory_space<vmem>>, %arg4: memref<16x16xbf16, #tpu.memory_space<vmem>>, %arg5: memref<16x1xf32, #tpu.memory_space<vmem>>, %arg6: memref<16x16xbf16, #tpu.memory_space<vmem>>, %arg7: memref<16x1xf32, #tpu.memory_space<vmem>>, %arg8: memref<16x128xf32, #tpu.memory_space<vmem>>) attributes {dimension_semantics = [#tpu.dimension_semantics<parallel>], iteration_bounds = array<i64: 1>, scalar_prefetch = 0 : i64, scratch_operands = 0 : i64, tpu.core_type = #tpu.core_type<tc>, window_params = [{transform_indices = @transform_0, window_bounds = array<i64: 16, 128>}, {pipeline_mode = #tpu.pipeline_mode<synchronous>, transform_indices = @transform_1, window_bounds = array<i64: 16, 16>}, {pipeline_mode = #tpu.pipeline_mode<synchronous>, transform_indices = @transform_2, window_bounds = array<i64: 16, 1>}, {pipeline_mode = #tpu.pipeline_mode<synchronous>, transform_indices = @transform_3, window_bounds = array<i64: 16, 16>}, {pipeline_mode = #tpu.pipeline_mode<synchronous>, transform_indices = @transform_4, window_bounds = array<i64: 16, 1>}, {pipeline_mode = #tpu.pipeline_mode<synchronous>, transform_indices = @transform_5, window_bounds = array<i64: 16, 16>}, {pipeline_mode = #tpu.pipeline_mode<synchronous>, transform_indices = @transform_6, window_bounds = array<i64: 16, 1>}, {transform_indices = @transform_7, window_bounds = array<i64: 16, 128>}]} {
    %c0 = arith.constant 0 : index
    %c0_0 = arith.constant 0 : index
    %0 = vector.load %arg2[%c0, %c0_0] : memref<16x16xbf16, #tpu.memory_space<vmem>>, vector<16x16xbf16>
    %c0_1 = arith.constant 0 : index
    %c0_2 = arith.constant 0 : index
    %1 = vector.load %arg1[%c0_1, %c0_2] : memref<16x128xbf16, #tpu.memory_space<vmem>>, vector<16x128xbf16>
    %cst = arith.constant dense<0.000000e+00> : vector<16x128xf32>
    %2 = tpu.matmul %0, %1, %cst {dimension_numbers = #tpu.dot_dimension_numbers<[1], [0], [0], [1], [0, 0, 1, 1], [], []>} : vector<16x16xbf16>, vector<16x128xbf16>, vector<16x128xf32> -> vector<16x128xf32>
    %c0_3 = arith.constant 0 : index
    %c0_4 = arith.constant 0 : index
    %3 = vector.load %arg3[%c0_3, %c0_4] : memref<16x1xf32, #tpu.memory_space<vmem>>, vector<16x1xf32>
    %4 = vector.broadcast %3 : vector<16x1xf32> to vector<16x128xf32>
    %5 = arith.addf %2, %4 : vector<16x128xf32>
    %cst_5 = arith.constant 0.000000e+00 : f32
    %6 = vector.broadcast %cst_5 : f32 to vector<16x128xf32>
    %7 = arith.maximumf %5, %6 : vector<16x128xf32>
    %c0_6 = arith.constant 0 : index
    %c0_7 = arith.constant 0 : index
    %8 = vector.load %arg4[%c0_6, %c0_7] : memref<16x16xbf16, #tpu.memory_space<vmem>>, vector<16x16xbf16>
    %9 = arith.truncf %7 : vector<16x128xf32> to vector<16x128xbf16>
    %cst_8 = arith.constant dense<0.000000e+00> : vector<16x128xf32>
    %10 = tpu.matmul %8, %9, %cst_8 {dimension_numbers = #tpu.dot_dimension_numbers<[1], [0], [0], [1], [0, 0, 1, 1], [], []>} : vector<16x16xbf16>, vector<16x128xbf16>, vector<16x128xf32> -> vector<16x128xf32>
    %c0_9 = arith.constant 0 : index
    %c0_10 = arith.constant 0 : index
    %11 = vector.load %arg5[%c0_9, %c0_10] : memref<16x1xf32, #tpu.memory_space<vmem>>, vector<16x1xf32>
    %12 = vector.broadcast %11 : vector<16x1xf32> to vector<16x128xf32>
    %13 = arith.addf %10, %12 : vector<16x128xf32>
    %cst_11 = arith.constant 0.000000e+00 : f32
    %14 = vector.broadcast %cst_11 : f32 to vector<16x128xf32>
    %15 = arith.maximumf %13, %14 : vector<16x128xf32>
    %c0_12 = arith.constant 0 : index
    %c0_13 = arith.constant 0 : index
    %16 = vector.load %arg6[%c0_12, %c0_13] : memref<16x16xbf16, #tpu.memory_space<vmem>>, vector<16x16xbf16>
    %17 = arith.truncf %15 : vector<16x128xf32> to vector<16x128xbf16>
    %cst_14 = arith.constant dense<0.000000e+00> : vector<16x128xf32>
    %18 = tpu.matmul %16, %17, %cst_14 {dimension_numbers = #tpu.dot_dimension_numbers<[1], [0], [0], [1], [0, 0, 1, 1], [], []>} : vector<16x16xbf16>, vector<16x128xbf16>, vector<16x128xf32> -> vector<16x128xf32>
    %c0_15 = arith.constant 0 : index
    %c0_16 = arith.constant 0 : index
    %19 = vector.load %arg7[%c0_15, %c0_16] : memref<16x1xf32, #tpu.memory_space<vmem>>, vector<16x1xf32>
    %20 = vector.broadcast %19 : vector<16x1xf32> to vector<16x128xf32>
    %21 = arith.addf %18, %20 : vector<16x128xf32>
    %cst_17 = arith.constant 0.000000e+00 : f32
    %22 = vector.broadcast %cst_17 : f32 to vector<16x128xf32>
    %23 = arith.maximumf %21, %22 : vector<16x128xf32>
    %c0_18 = arith.constant 0 : index
    %c0_19 = arith.constant 0 : index
    %24 = vector.load %arg8[%c0_18, %c0_19] : memref<16x128xf32, #tpu.memory_space<vmem>>, vector<16x128xf32>
    tpu.vector_store %arg8[%c0_18, %c0_19], %23 {strides = array<i32>} : memref<16x128xf32, #tpu.memory_space<vmem>>, vector<16x128xf32>,
    return
  }
  func.func @transform_0(%arg0: i32) -> (i32, i32) {
    %c0_i32 = arith.constant 0 : i32
    %c0_i32_0 = arith.constant 0 : i32
    return %c0_i32, %arg0 : i32, i32
  }
  func.func @transform_1(%arg0: i32) -> (i32, i32) {
    %c0_i32 = arith.constant 0 : i32
    %c0_i32_0 = arith.constant 0 : i32
    %c0_i32_1 = arith.constant 0 : i32
    return %c0_i32, %c0_i32_0 : i32, i32
  }
  func.func @transform_2(%arg0: i32) -> (i32, i32) {
    %c0_i32 = arith.constant 0 : i32
    %c0_i32_0 = arith.constant 0 : i32
    %c0_i32_1 = arith.constant 0 : i32
    return %c0_i32, %c0_i32_0 : i32, i32
  }
  func.func @transform_3(%arg0: i32) -> (i32, i32) {
    %c0_i32 = arith.constant 0 : i32
    %c0_i32_0 = arith.constant 0 : i32
    %c0_i32_1 = arith.constant 0 : i32
    return %c0_i32, %c0_i32_0 : i32, i32
  }
  func.func @transform_4(%arg0: i32) -> (i32, i32) {
    %c0_i32 = arith.constant 0 : i32
    %c0_i32_0 = arith.constant 0 : i32
    %c0_i32_1 = arith.constant 0 : i32
    return %c0_i32, %c0_i32_0 : i32, i32
  }
  func.func @transform_5(%arg0: i32) -> (i32, i32) {
    %c0_i32 = arith.constant 0 : i32
    %c0_i32_0 = arith.constant 0 : i32
    %c0_i32_1 = arith.constant 0 : i32
    return %c0_i32, %c0_i32_0 : i32, i32
  }
  func.func @transform_6(%arg0: i32) -> (i32, i32) {
    %c0_i32 = arith.constant 0 : i32
    %c0_i32_0 = arith.constant 0 : i32
    %c0_i32_1 = arith.constant 0 : i32
    return %c0_i32, %c0_i32_0 : i32, i32
  }
  func.func @transform_7(%arg0: i32) -> (i32, i32) {
    %c0_i32 = arith.constant 0 : i32
    %c0_i32_0 = arith.constant 0 : i32
    return %c0_i32, %arg0 : i32, i32
  }
}

</mosaic_0001>

<llo_original>
// kernel: tpu_custom_call.1
$region0: #{tpu_custom_call.1}
  #allocation0 [shape = 'u32[]', space=smem, size = 0x4, offset = 0x4, fixed_abs, tag = 'smem constant byte address 0x4 - core index']
  #allocation1 [shape = 'u32[144,128]{1,0:T(1,128)}', space=vmem, size = 0x12000, scoped, tag = 'internal scratch']
  %s0 = inlined_call_operand.vmem [shape: bf16[16,128], index: 0, kind: input, shape index: {}]
  %s1 = inlined_call_operand.vmem [shape: bf16[16,16], index: 1, kind: input, shape index: {}]
  %s2 = inlined_call_operand.vmem [shape: f32[16,1], index: 2, kind: input, shape index: {}]
  %s3 = inlined_call_operand.vmem [shape: bf16[16,16], index: 3, kind: input, shape index: {}]
  %s4 = inlined_call_operand.vmem [shape: f32[16,1], index: 4, kind: input, shape index: {}]
  %s5 = inlined_call_operand.vmem [shape: bf16[16,16], index: 5, kind: input, shape index: {}]
  %s6 = inlined_call_operand.vmem [shape: f32[16,1], index: 6, kind: input, shape index: {}]
  %s7 = inlined_call_operand.hbm [shape: f32[16,128], index: 7, kind: output, shape index: {}]
  %s8 = sld [smem:[#allocation0]]
  $region38: #{tpu_custom_call.1} parent=0
    _
  %s10 = ssub.s32 1, %s8
  %s11 = scalar_select 0, %s10, %s8
  $region1: #{tpu_custom_call.1} parent=0
    #allocation2 [shape = 'u8[8192]{0}', space=vmem, size = 0x2000, scoped, tag = 'output window, operand 0, single buffered']
    #allocation3 [shape = 's32[1]{0}', space=sflag, size = 0x4, scoped, tag = 'scoped memory for tpu_custom_call.1']
    %12 = vsyncpa [#allocation3], 0
    // Predicated region
    $region2: #{tpu_custom_call.1} parent=1 // pred_check
      _
    $region3: #{tpu_custom_call.1} parent=1 // pred_check_branch
      %14 = sbr.rel (0) target = $region5
    $region4: #{tpu_custom_call.1} parent=1 // pred_region
      _
    $region5: #{tpu_custom_call.1} parent=1 // pred_fallthru
      _
    // Predicated region
    $region6: #{tpu_custom_call.1} parent=1 // pred_check
      _
    $region7: #{tpu_custom_call.1} parent=1 // pred_check_branch
      %16 = sbr.rel (0) target = $region9
    $region8: #{tpu_custom_call.1} parent=1 // pred_region
      _
    $region9: #{tpu_custom_call.1} parent=1 // pred_fallthru
      _
    // Predicated region
    $region10: #{tpu_custom_call.1} parent=1 // pred_check
      _
    $region11: #{tpu_custom_call.1} parent=1 // pred_check_branch
      %18 = sbr.rel (0) target = $region13
    $region12: #{tpu_custom_call.1} parent=1 // pred_region
      _
    $region13: #{tpu_custom_call.1} parent=1 // pred_fallthru
      _
    // Predicated region
    $region14: #{tpu_custom_call.1} parent=1 // pred_check
      _
    $region15: #{tpu_custom_call.1} parent=1 // pred_check_branch
      %20 = sbr.rel (0) target = $region17
    $region16: #{tpu_custom_call.1} parent=1 // pred_region
      _
    $region17: #{tpu_custom_call.1} parent=1 // pred_fallthru
      _
    // Predicated region
    $region18: #{tpu_custom_call.1} parent=1 // pred_check
      _
    $region19: #{tpu_custom_call.1} parent=1 // pred_check_branch
      %22 = sbr.rel (0) target = $region21
    $region20: #{tpu_custom_call.1} parent=1 // pred_region
      _
    $region21: #{tpu_custom_call.1} parent=1 // pred_fallthru
      _
    // Predicated region
    $region22: #{tpu_custom_call.1} parent=1 // pred_check
      _
    $region23: #{tpu_custom_call.1} parent=1 // pred_check_branch
      %24 = sbr.rel (0) target = $region25
    $region24: #{tpu_custom_call.1} parent=1 // pred_region
      _
    $region25: #{tpu_custom_call.1} parent=1 // pred_fallthru
      _
    // Predicated region
    $region26: #{tpu_custom_call.1} parent=1 // pred_check
      _
    $region27: #{tpu_custom_call.1} parent=1 // pred_check_branch
      %26 = sbr.rel (0) target = $region29
    $region28: #{tpu_custom_call.1} parent=1 // pred_region
      _
    $region29: #{tpu_custom_call.1} parent=1 // pred_fallthru
      _
    %v28 = vld [vmem:[%s1] sm:$0xf]
    %v29 = vld [vmem:[%s1 + $0x4] sm:$0xf]
    %v30 = vld [vmem:[%s0] sm:$0xf]
    %v31 = vld [vmem:[%s0 + $0x4] sm:$0xf]
    %v32 = vld [vmem:[%s2] sm:$0xff]
    %v33 = vld [vmem:[%s2 + $0x8] sm:$0xff]
    %35 = vset.pattern.permute.xlu0 0
    %36 = vperm.xlu0 %35, %v32
    %v37 = vpop.permute.xlu0 %36
    %40 = vset.pattern.permute.xlu0 0
    %41 = vperm.xlu0 %40, %v33
    %v42 = vpop.permute.xlu0 %41
    %v46 = vunpack.c.l.b16 %v28
    %v47 = vunpack.c.l.b16 %v29
    %v48 = vpack.c.b16 %v47, %v46
    %v51 = vunpack.c.l.b16 %v30
    %v52 = vunpack.c.l.b16 %v31
    %v53 = vpack.c.b16 %v52, %v51
    %vm55 = vcmask 130048
    %v57 = vsel %vm55, %v48, 0
    %59 = vmatprep.subr.bf16.mxu0 0
    %60 = vmatpush1.bf16.msra.mxu0 %v53
    %61 = vmatprep.subr.bf16.mxu0 0
    %62 = vmatpush1.bf16.msra.mxu0 0
    %63 = vmatprep.subr.bf16.mxu0 0
    %64 = vmatpush1.bf16.msra.mxu0 0
    %65 = vmatprep.subr.bf16.mxu0 0
    %66 = vmatpush1.bf16.msra.mxu0 0
    %67 = vmatprep.subr.bf16.mxu0 0
    %68 = vmatpush1.bf16.msra.mxu0 0
    %69 = vmatprep.subr.bf16.mxu0 0
    %70 = vmatpush1.bf16.msra.mxu0 0
    %71 = vmatprep.subr.bf16.mxu0 0
    %72 = vmatpush1.bf16.msra.mxu0 0
    %73 = vmatprep.subr.bf16.mxu0 0
    %74 = vmatpush1.bf16.msra.mxu0 0
    %75 = vmatprep.subr.bf16.mxu0 0
    %76 = vmatpush1.bf16.msra.mxu0 0
    %77 = vmatprep.subr.bf16.mxu0 0
    %78 = vmatpush1.bf16.msra.mxu0 0
    %79 = vmatprep.subr.bf16.mxu0 0
    %80 = vmatpush1.bf16.msra.mxu0 0
    %81 = vmatprep.subr.bf16.mxu0 0
    %82 = vmatpush1.bf16.msra.mxu0 0
    %83 = vmatprep.subr.bf16.mxu0 0
    %84 = vmatpush1.bf16.msra.mxu0 0
    %85 = vmatprep.subr.bf16.mxu0 0
    %86 = vmatpush1.bf16.msra.mxu0 0
    %87 = vmatprep.subr.bf16.mxu0 0
    %88 = vmatpush1.bf16.msra.mxu0 0
    %89 = vmatprep.subr.bf16.mxu0 0
    %90 = vmatpush1.bf16.msra.mxu0 0
    %91 = vmatprep.mubr.bf16.mxu0 0
    %92 = vmatmul.mubr.bf16.gmra.mrb[0].mxu0 %v57
    %v93 = vpop.f32.mrb[0].mxu0
    %v94 = vadd.f32 %v37, %v93
    %v95 = vpop.f32.mrb[0].mxu0
    %v96 = vpop.f32.mrb[0].mxu0
    %v97 = vadd.f32 %v42, %v96
    %v98 = vpop.f32.mrb[0].mxu0
    %99 = vdwg.mxu0
    %v100 = vmax.f32 %v94, 0.0
    %v101 = vmax.f32 %v97, 0.0
    %v102 = vld [vmem:[%s3] sm:$0xf]
    %v103 = vld [vmem:[%s3 + $0x4] sm:$0xf]
    %v104 = vpack.c.bf16 %v101, %v100
    %v105 = vld [vmem:[%s4] sm:$0xff]
    %v106 = vld [vmem:[%s4 + $0x8] sm:$0xff]
    %108 = vset.pattern.permute.xlu0 0
    %109 = vperm.xlu0 %108, %v105
    %v110 = vpop.permute.xlu0 %109
    %113 = vset.pattern.permute.xlu0 0
    %114 = vperm.xlu0 %113, %v106
    %v115 = vpop.permute.xlu0 %114
    %v119 = vunpack.c.l.b16 %v102
    %v120 = vunpack.c.l.b16 %v103
    %v121 = vpack.c.b16 %v120, %v119
    %v123 = vsel %vm55, %v121, 0
    %125 = vmatprep.subr.bf16.mxu0 0
    %126 = vmatpush1.bf16.msra.mxu0 %v104
    %127 = vmatprep.subr.bf16.mxu0 0
    %128 = vmatpush1.bf16.msra.mxu0 0
    %129 = vmatprep.subr.bf16.mxu0 0
    %130 = vmatpush1.bf16.msra.mxu0 0
    %131 = vmatprep.subr.bf16.mxu0 0
    %132 = vmatpush1.bf16.msra.mxu0 0
    %133 = vmatprep.subr.bf16.mxu0 0
    %134 = vmatpush1.bf16.msra.mxu0 0
    %135 = vmatprep.subr.bf16.mxu0 0
    %136 = vmatpush1.bf16.msra.mxu0 0
    %137 = vmatprep.subr.bf16.mxu0 0
    %138 = vmatpush1.bf16.msra.mxu0 0
    %139 = vmatprep.subr.bf16.mxu0 0
    %140 = vmatpush1.bf16.msra.mxu0 0
    %141 = vmatprep.subr.bf16.mxu0 0
    %142 = vmatpush1.bf16.msra.mxu0 0
    %143 = vmatprep.subr.bf16.mxu0 0
    %144 = vmatpush1.bf16.msra.mxu0 0
    %145 = vmatprep.subr.bf16.mxu0 0
    %146 = vmatpush1.bf16.msra.mxu0 0
    %147 = vmatprep.subr.bf16.mxu0 0
    %148 = vmatpush1.bf16.msra.mxu0 0
    %149 = vmatprep.subr.bf16.mxu0 0
    %150 = vmatpush1.bf16.msra.mxu0 0
    %151 = vmatprep.subr.bf16.mxu0 0
    %152 = vmatpush1.bf16.msra.mxu0 0
    %153 = vmatprep.subr.bf16.mxu0 0
    %154 = vmatpush1.bf16.msra.mxu0 0
    %155 = vmatprep.subr.bf16.mxu0 0
    %156 = vmatpush1.bf16.msra.mxu0 0
    %157 = vmatprep.mubr.bf16.mxu0 0
    %158 = vmatmul.mubr.bf16.gmra.mrb[0].mxu0 %v123
    %v159 = vpop.f32.mrb[0].mxu0
    %v160 = vadd.f32 %v110, %v159
    %v161 = vpop.f32.mrb[0].mxu0
    %v162 = vpop.f32.mrb[0].mxu0
    %v163 = vadd.f32 %v115, %v162
    %v164 = vpop.f32.mrb[0].mxu0
    %165 = vdwg.mxu0
    %v166 = vmax.f32 %v160, 0.0
    %v167 = vmax.f32 %v163, 0.0
    %v168 = vld [vmem:[%s5] sm:$0xf]
    %v169 = vld [vmem:[%s5 + $0x4] sm:$0xf]
    %v170 = vpack.c.bf16 %v167, %v166
    %v171 = vld [vmem:[%s6] sm:$0xff]
    %v172 = vld [vmem:[%s6 + $0x8] sm:$0xff]
    %174 = vset.pattern.permute.xlu0 0
    %175 = vperm.xlu0 %174, %v171
    %v176 = vpop.permute.xlu0 %175
    %179 = vset.pattern.permute.xlu0 0
    %180 = vperm.xlu0 %179, %v172
    %v181 = vpop.permute.xlu0 %180
    %v185 = vunpack.c.l.b16 %v168
    %v186 = vunpack.c.l.b16 %v169
    %v187 = vpack.c.b16 %v186, %v185
    %v189 = vsel %vm55, %v187, 0
    %191 = vmatprep.subr.bf16.mxu0 0
    %192 = vmatpush1.bf16.msra.mxu0 %v170
    %193 = vmatprep.subr.bf16.mxu0 0
    %194 = vmatpush1.bf16.msra.mxu0 0
    %195 = vmatprep.subr.bf16.mxu0 0
    %196 = vmatpush1.bf16.msra.mxu0 0
    %197 = vmatprep.subr.bf16.mxu0 0
    %198 = vmatpush1.bf16.msra.mxu0 0
    %199 = vmatprep.subr.bf16.mxu0 0
    %200 = vmatpush1.bf16.msra.mxu0 0
    %201 = vmatprep.subr.bf16.mxu0 0
    %202 = vmatpush1.bf16.msra.mxu0 0
    %203 = vmatprep.subr.bf16.mxu0 0
    %204 = vmatpush1.bf16.msra.mxu0 0
    %205 = vmatprep.subr.bf16.mxu0 0
    %206 = vmatpush1.bf16.msra.mxu0 0
    %207 = vmatprep.subr.bf16.mxu0 0
    %208 = vmatpush1.bf16.msra.mxu0 0
    %209 = vmatprep.subr.bf16.mxu0 0
    %210 = vmatpush1.bf16.msra.mxu0 0
    %211 = vmatprep.subr.bf16.mxu0 0
    %212 = vmatpush1.bf16.msra.mxu0 0
    %213 = vmatprep.subr.bf16.mxu0 0
    %214 = vmatpush1.bf16.msra.mxu0 0
    %215 = vmatprep.subr.bf16.mxu0 0
    %216 = vmatpush1.bf16.msra.mxu0 0
    %217 = vmatprep.subr.bf16.mxu0 0
    %218 = vmatpush1.bf16.msra.mxu0 0
    %219 = vmatprep.subr.bf16.mxu0 0
    %220 = vmatpush1.bf16.msra.mxu0 0
    %221 = vmatprep.subr.bf16.mxu0 0
    %222 = vmatpush1.bf16.msra.mxu0 0
    %223 = vmatprep.mubr.bf16.mxu0 0
    %224 = vmatmul.mubr.bf16.gmra.mrb[0].mxu0 %v189
    %v225 = vpop.f32.mrb[0].mxu0
    %v226 = vadd.f32 %v176, %v225
    %v227 = vpop.f32.mrb[0].mxu0
    %v228 = vpop.f32.mrb[0].mxu0
    %v229 = vadd.f32 %v181, %v228
    %v230 = vpop.f32.mrb[0].mxu0
    %231 = vdwg.mxu0
    %v232 = vmax.f32 %v226, 0.0
    %v233 = vmax.f32 %v229, 0.0
    %234 = vst [vmem:[#allocation2] sm:$0xff] %v232
    %235 = vst [vmem:[#allocation2 + $0x8] sm:$0xff] %v233
    // Predicated region
    $region30: #{tpu_custom_call.1} parent=1 // pred_check
      _
    $region31: #{tpu_custom_call.1} parent=1 // pred_check_branch
      %237 = sbr.rel (0) target = $region33
    $region32: #{tpu_custom_call.1} parent=1 // pred_region
      %s239 = ssub.s32 256, 256
      %240 = vsyncadd [#allocation3], %s239
      %s241 = sshll.u32 [#allocation2], 4
      %s242 = int_to_ptr.vmem [resolvable:$true] %s241
      %247 = dma.vmem_to_hbm [thread:$0]  %s242, 256, %s7, [#allocation3], 128, 128, 8
    $region33: #{tpu_custom_call.1} parent=1 // pred_fallthru
      _
    // Predicated region
    $region34: #{tpu_custom_call.1} parent=1 // pred_check
      _
    $region35: #{tpu_custom_call.1} parent=1 // pred_check_branch
      %249 = sbr.rel (0) target = $region37
    $region36: #{tpu_custom_call.1} parent=1 // pred_region
      %250 = dma.done [#allocation3], 256
    $region37: #{tpu_custom_call.1} parent=1 // pred_fallthru
      _
    %251 = vsyncpa [#allocation3], 1

</llo_original>
